<compile_context>
chip_gen: v7x
topology: tpu7x:2x2x1
jax: 0.10.0
libtpu: 0.0.40
codegen_flags: <defaults>
</compile_context>

<pallas_src>
import functools
import math

import jax
import jax.numpy as jnp
from jax.experimental import pallas as pl
from jax.experimental.pallas import tpu as pltpu


def _round_up(x, m):
    return (x + m - 1) // m * m


def _pad_last(x, target):
    pad = target - x.shape[-1]
    if pad == 0:
        return x
    return jnp.pad(x, ((0, 0), (0, 0), (0, pad)))


def _attn_kernel(vlen_ref, q_ref, k_ref, v_ref, o_ref, *w_refs, scale, bb, masked):
    """One grid step == one (batch-block, query-tile).

    vlen_ref : SMEM (B,) int32        scalar-prefetched valid lengths
    q_ref    : VMEM (Bb, Tqb, dp)
    k_ref    : VMEM (Bb, Tk,  dp)
    v_ref    : VMEM (Bb, Tk,  dvp)
    o_ref    : VMEM (Bb, Tqb, dvp)    attention output (lane-dense padded dv)
    w_refs   : optionally one VMEM (Bb, Tqb, Tk) ref for the attention weights
    """
    q = q_ref[...]
    k = k_ref[...]
    v = v_ref[...]

    # Fold 1/sqrt(d) into Q (fewer VPU multiplies than scaling the score tile).
    q = q * jnp.asarray(scale, dtype=q.dtype)

    # scores = Q K^T : batched MXU matmul, transpose expressed as dimension
    # numbers (contract last dim of both), f32 accumulation.
    scores = jax.lax.dot_general(
        q, k,
        dimension_numbers=(((2,), (2,)), ((0,), (0,))),
        preferred_element_type=jnp.float32)                  # (Bb, Tqb, Tk) f32

    _, tqb, tk = scores.shape

    if masked:
        # Masked softmax: key positions >= valid_len are set to -1e6
        # (exactly the PyTorch sequence_mask value), then ordinary softmax.
        base = pl.program_id(0) * bb
        col = jax.lax.broadcasted_iota(jnp.int32, (bb, 1, tk), 2)
        vl = jnp.concatenate(
            [jnp.full((1, 1, tk), vlen_ref[base + j], dtype=jnp.int32)
             for j in range(bb)], axis=0)                    # (Bb, 1, Tk)
        scores = jnp.where(col < vl, scores, jnp.float32(-1000000.0))

    m = jnp.max(scores, axis=-1, keepdims=True)
    e = jnp.exp(scores - m)
    denom = jnp.sum(e, axis=-1, keepdims=True)
    w = e * pl.reciprocal(denom, approx=True)                # EUP vrcp slot

    if w_refs:
        w_refs[0][...] = w.astype(w_refs[0].dtype)

    # dropout(p) in eval mode == identity
    o = jax.lax.dot_general(
        w.astype(v.dtype), v,
        dimension_numbers=(((2,), (1,)), ((0,), (0,))),
        preferred_element_type=jnp.float32)                  # (Bb, Tqb, dvp)
    o_ref[...] = o.astype(o_ref.dtype)


@functools.partial(jax.jit, static_argnames=("return_attention_weights",))
def dot_product_attention(queries, keys, values, valid_lens=None, *,
                          return_attention_weights=False):
    """queries (B,Tq,d), keys (B,Tk,d), values (B,Tk,dv), valid_lens (B,) int or None.

    Returns output (B,Tq,dv); additionally the attention weights (B,Tq,Tk)
    when return_attention_weights=True.
    """
    B, Tq, d = queries.shape
    _, Tk, dv = values.shape

    masked = valid_lens is not None
    if valid_lens is None:
        valid_lens = jnp.full((B,), Tk, dtype=jnp.int32)
    valid_lens = valid_lens.astype(jnp.int32)

    # Lane-dense padding of contraction / output feature dims (zeros are
    # exact no-ops for QK^T and give zero columns in o that are sliced off).
    dp = _round_up(d, 128)
    dvp = _round_up(dv, 128)
    qp = _pad_last(queries, dp)
    kp = _pad_last(keys, dp)
    vp = _pad_last(values, dvp)

    # Fold up to 8 batch elements into one grid step; tile Tq to 128/256 when
    # it is large enough, otherwise take the full Tq.
    bb = max(x for x in range(1, min(B, 8) + 1) if B % x == 0)
    if Tq % 256 == 0:
        tqb = 256
    elif Tq % 128 == 0:
        tqb = 128
    else:
        tqb = Tq
    grid = (B // bb, Tq // tqb)

    kernel = functools.partial(_attn_kernel, scale=1.0 / math.sqrt(d),
                               bb=bb, masked=masked)

    in_specs = [
        pl.BlockSpec((bb, tqb, dp), lambda b, qi, vl: (b, qi, 0)),
        pl.BlockSpec((bb, Tk, dp), lambda b, qi, vl: (b, 0, 0)),
        pl.BlockSpec((bb, Tk, dvp), lambda b, qi, vl: (b, 0, 0)),
    ]
    o_shape = jax.ShapeDtypeStruct((B, Tq, dvp), queries.dtype)
    o_spec = pl.BlockSpec((bb, tqb, dvp), lambda b, qi, vl: (b, qi, 0))

    if return_attention_weights:
        out_shape = (o_shape, jax.ShapeDtypeStruct((B, Tq, Tk), queries.dtype))
        out_specs = (o_spec,
                     pl.BlockSpec((bb, tqb, Tk), lambda b, qi, vl: (b, qi, 0)))
    else:
        out_shape = o_shape
        out_specs = o_spec

    outs = pl.pallas_call(
        kernel,
        out_shape=out_shape,
        grid_spec=pltpu.PrefetchScalarGridSpec(
            num_scalar_prefetch=1,          # valid_lens -> SMEM
            grid=grid,
            in_specs=in_specs,
            out_specs=out_specs),
        compiler_params=pltpu.CompilerParams(
            dimension_semantics=("parallel", "parallel")),
    )(valid_lens, qp, kp, vp)

    if return_attention_weights:
        o_pad, w = outs
        return o_pad[..., :dv], w
    return outs[..., :dv]


def _reference(queries, keys, values, valid_lens):
    """Pure-JAX reference mirroring the PyTorch forward."""
    d = queries.shape[-1]
    scores = jnp.einsum("bqd,bkd->bqk", queries, keys) / math.sqrt(d)
    if valid_lens is not None:
        Tk = scores.shape[-1]
        col = jnp.arange(Tk)[None, None, :]
        scores = jnp.where(col < valid_lens[:, None, None], scores, -1000000.0)
    w = jax.nn.softmax(scores, axis=-1)
    return jnp.einsum("bqk,bkv->bqv", w, values), w


if __name__ == "__main__":
    # Small shapes consistent with the module: batch=2, Tq=8, Tk=8, d=32, dv=32
    B, Tq, Tk, d, dv = 2, 8, 8, 32, 32
    key = jax.random.PRNGKey(0)
    kq, kk, kv = jax.random.split(key, 3)
    queries = jax.random.normal(kq, (B, Tq, d), dtype=jnp.float32)
    keys = jax.random.normal(kk, (B, Tk, d), dtype=jnp.float32)
    values = jax.random.normal(kv, (B, Tk, dv), dtype=jnp.float32)
    valid_lens = jnp.array([3, 6], dtype=jnp.int32)

    # Full path: output + attention weights.
    out, attn_w = dot_product_attention(queries, keys, values, valid_lens,
                                        return_attention_weights=True)
    out = jax.block_until_ready(out)
    attn_w = jax.block_until_ready(attn_w)

    # Fast path: output only (no (B,Tq,Tk) HBM writeback).
    out_fast = jax.block_until_ready(
        dot_product_attention(queries, keys, values, valid_lens))

    # valid_lens=None path (plain softmax, mask skipped statically).
    out_none = jax.block_until_ready(
        dot_product_attention(queries, keys, values))

    ref_out, ref_w = _reference(queries, keys, values, valid_lens)
    ref_out_none, _ = _reference(queries, keys, values, None)

    # Tolerances account for the EUP approximate reciprocal in the softmax.
    assert jnp.allclose(out, ref_out, atol=2e-3, rtol=2e-3), "output mismatch"
    assert jnp.allclose(out_fast, ref_out, atol=2e-3, rtol=2e-3), "fast-path output mismatch"
    assert jnp.allclose(attn_w, ref_w, atol=2e-3, rtol=2e-3), "weights mismatch"
    assert jnp.allclose(out_none, ref_out_none, atol=2e-3, rtol=2e-3), "no-mask output mismatch"

    print("KERNEL_OK")
</pallas_src>

<mosaic_0001>
module attributes {stable_mosaic.version = 11 : i64} {
  func.func @_attn_kernel(%arg0: i32, %arg1: i32, %arg2: memref<2xi32, #tpu.memory_space<smem>>, %arg3: memref<2x8x128xf32, #tpu.memory_space<vmem>>, %arg4: memref<2x8x128xf32, #tpu.memory_space<vmem>>, %arg5: memref<2x8x128xf32, #tpu.memory_space<vmem>>, %arg6: memref<2x8x128xf32, #tpu.memory_space<vmem>>, %arg7: memref<2x8x8xf32, #tpu.memory_space<vmem>>) attributes {dimension_semantics = [#tpu.dimension_semantics<parallel>, #tpu.dimension_semantics<parallel>], iteration_bounds = array<i64: 1, 1>, scalar_prefetch = 1 : i64, scratch_operands = 0 : i64, tpu.core_type = #tpu.core_type<tc>, window_params = [{transform_indices = @transform_0, window_bounds = array<i64: 2, 8, 128>}, {transform_indices = @transform_1, window_bounds = array<i64: 2, 8, 128>}, {transform_indices = @transform_2, window_bounds = array<i64: 2, 8, 128>}, {transform_indices = @transform_3, window_bounds = array<i64: 2, 8, 128>}, {transform_indices = @transform_4, window_bounds = array<i64: 2, 8, 8>}]} {
    %c0 = arith.constant 0 : index
    %c0_0 = arith.constant 0 : index
    %c0_1 = arith.constant 0 : index
    %0 = vector.load %arg3[%c0, %c0_0, %c0_1] : memref<2x8x128xf32, #tpu.memory_space<vmem>>, vector<2x8x128xf32>
    %c0_2 = arith.constant 0 : index
    %c0_3 = arith.constant 0 : index
    %c0_4 = arith.constant 0 : index
    %1 = vector.load %arg4[%c0_2, %c0_3, %c0_4] : memref<2x8x128xf32, #tpu.memory_space<vmem>>, vector<2x8x128xf32>
    %c0_5 = arith.constant 0 : index
    %c0_6 = arith.constant 0 : index
    %c0_7 = arith.constant 0 : index
    %2 = vector.load %arg5[%c0_5, %c0_6, %c0_7] : memref<2x8x128xf32, #tpu.memory_space<vmem>>, vector<2x8x128xf32>
    %cst = arith.constant 0.176776692 : f32
    %3 = vector.broadcast %cst : f32 to vector<2x8x128xf32>
    %4 = arith.mulf %0, %3 : vector<2x8x128xf32>
    %cst_8 = arith.constant dense<0.000000e+00> : vector<2x8x8xf32>
    %5 = tpu.matmul %4, %1, %cst_8 {dimension_numbers = #tpu.dot_dimension_numbers<[2], [2], [1], [1], [0, 0, 0, 1, 1, 1], [0], [0]>} : vector<2x8x128xf32>, vector<2x8x128xf32>, vector<2x8x8xf32> -> vector<2x8x8xf32>
    %c2_i32 = arith.constant 2 : i32
    %6 = arith.muli %arg0, %c2_i32 : i32
    %7 = tpu.iota {dimensions = array<i32: 2>} : vector<2x1x8xi32>
    %c0_i32 = arith.constant 0 : i32
    %8 = arith.addi %6, %c0_i32 : i32
    %9 = arith.index_cast %8 : i32 to index
    %10 = memref.load %arg2[%9] : memref<2xi32, #tpu.memory_space<smem>>
    %11 = vector.broadcast %10 : i32 to vector<1x1x8xi32>
    %c1_i32 = arith.constant 1 : i32
    %12 = arith.addi %6, %c1_i32 : i32
    %13 = arith.index_cast %12 : i32 to index
    %14 = memref.load %arg2[%13] : memref<2xi32, #tpu.memory_space<smem>>
    %15 = vector.broadcast %14 : i32 to vector<1x1x8xi32>
    %16 = tpu.concatenate %11, %15 in 0 : vector<1x1x8xi32>, vector<1x1x8xi32> -> vector<2x1x8xi32>
    %17 = arith.cmpi slt, %7, %16 : vector<2x1x8xi32>
    %cst_9 = arith.constant -1.000000e+06 : f32
    %18 = vector.shape_cast %17 : vector<2x1x8xi1> to vector<2x1x8xi1>
    %19 = vector.broadcast %18 : vector<2x1x8xi1> to vector<2x8x8xi1>
    %20 = vector.broadcast %cst_9 : f32 to vector<2x8x8xf32>
    %21 = arith.select %19, %5, %20 : vector<2x8x8xi1>, vector<2x8x8xf32>
    %cst_10 = arith.constant dense<0xFF800000> : vector<2x8xf32>
    %22 = vector.multi_reduction <maximumf>, %21, %cst_10 [2] : vector<2x8x8xf32> to vector<2x8xf32>
    %23 = vector.shape_cast %22 : vector<2x8xf32> to vector<2x8x1xf32>
    %24 = vector.broadcast %23 : vector<2x8x1xf32> to vector<2x8x8xf32>
    %25 = arith.subf %21, %24 : vector<2x8x8xf32>
    %26 = math.exp %25 : vector<2x8x8xf32>
    %cst_11 = arith.constant dense<0.000000e+00> : vector<2x8xf32>
    %27 = vector.multi_reduction <add>, %26, %cst_11 [2] : vector<2x8x8xf32> to vector<2x8xf32>
    %28 = vector.shape_cast %27 : vector<2x8xf32> to vector<2x8x1xf32>
    %29 = tpu.reciprocal %28 {approx = true} : vector<2x8x1xf32> -> vector<2x8x1xf32>
    %30 = vector.broadcast %29 : vector<2x8x1xf32> to vector<2x8x8xf32>
    %31 = arith.mulf %26, %30 : vector<2x8x8xf32>
    %c0_12 = arith.constant 0 : index
    %c0_13 = arith.constant 0 : index
    %c0_14 = arith.constant 0 : index
    %32 = vector.load %arg7[%c0_12, %c0_13, %c0_14] : memref<2x8x8xf32, #tpu.memory_space<vmem>>, vector<2x8x8xf32>
    tpu.vector_store %arg7[%c0_12, %c0_13, %c0_14], %31 {strides = array<i32>} : memref<2x8x8xf32, #tpu.memory_space<vmem>>, vector<2x8x8xf32>,
    %cst_15 = arith.constant dense<0.000000e+00> : vector<2x8x128xf32>
    %33 = tpu.matmul %31, %2, %cst_15 {dimension_numbers = #tpu.dot_dimension_numbers<[2], [1], [1], [2], [0, 0, 0, 1, 1, 2], [0], [0]>} : vector<2x8x8xf32>, vector<2x8x128xf32>, vector<2x8x128xf32> -> vector<2x8x128xf32>
    %c0_16 = arith.constant 0 : index
    %c0_17 = arith.constant 0 : index
    %c0_18 = arith.constant 0 : index
    %34 = vector.load %arg6[%c0_16, %c0_17, %c0_18] : memref<2x8x128xf32, #tpu.memory_space<vmem>>, vector<2x8x128xf32>
    tpu.vector_store %arg6[%c0_16, %c0_17, %c0_18], %33 {strides = array<i32>} : memref<2x8x128xf32, #tpu.memory_space<vmem>>, vector<2x8x128xf32>,
    return
  }
  func.func @transform_0(%arg0: i32, %arg1: i32, %arg2: memref<2xi32, #tpu.memory_space<smem>>) -> (i32, i32, i32) {
    %c0_i32 = arith.constant 0 : i32
    %c0_i32_0 = arith.constant 0 : i32
    return %arg0, %arg1, %c0_i32 : i32, i32, i32
  }
  func.func @transform_1(%arg0: i32, %arg1: i32, %arg2: memref<2xi32, #tpu.memory_space<smem>>) -> (i32, i32, i32) {
    %c0_i32 = arith.constant 0 : i32
    %c0_i32_0 = arith.constant 0 : i32
    %c0_i32_1 = arith.constant 0 : i32
    return %arg0, %c0_i32, %c0_i32_0 : i32, i32, i32
  }
  func.func @transform_2(%arg0: i32, %arg1: i32, %arg2: memref<2xi32, #tpu.memory_space<smem>>) -> (i32, i32, i32) {
    %c0_i32 = arith.constant 0 : i32
    %c0_i32_0 = arith.constant 0 : i32
    %c0_i32_1 = arith.constant 0 : i32
    return %arg0, %c0_i32, %c0_i32_0 : i32, i32, i32
  }
  func.func @transform_3(%arg0: i32, %arg1: i32, %arg2: memref<2xi32, #tpu.memory_space<smem>>) -> (i32, i32, i32) {
    %c0_i32 = arith.constant 0 : i32
    %c0_i32_0 = arith.constant 0 : i32
    return %arg0, %arg1, %c0_i32 : i32, i32, i32
  }
  func.func @transform_4(%arg0: i32, %arg1: i32, %arg2: memref<2xi32, #tpu.memory_space<smem>>) -> (i32, i32, i32) {
    %c0_i32 = arith.constant 0 : i32
    %c0_i32_0 = arith.constant 0 : i32
    return %arg0, %arg1, %c0_i32 : i32, i32, i32
  }
}

</mosaic_0001>

<llo_original>
// kernel: dot_product_attention.1
$region0: #{dot_product_attention.1}
  #allocation0 [shape = 'u32[]', space=smem, size = 0x4, offset = 0x4, fixed_abs, tag = 'smem constant byte address 0x4 - core index']
  #allocation1 [shape = 'u32[144,128]{1,0:T(1,128)}', space=vmem, size = 0x12000, scoped, tag = 'internal scratch']
  #allocation2 [shape = 's32[1]{0}', space=sflag, size = 0x4, scoped, tag = 'scoped memory for dot_product_attention.1']
  #allocation3 [shape = 'u8[512]{0}', space=smem, size = 0x200, scoped, tag = 'prefetched SMEM operand 0']
  %s0 = inlined_call_operand.vmem [shape: s32[2], index: 0, kind: input, shape index: {}]
  %s1 = inlined_call_operand.vmem [shape: f32[2,8,128], index: 1, kind: input, shape index: {}]
  %s2 = inlined_call_operand.vmem [shape: f32[2,8,128], index: 2, kind: input, shape index: {}]
  %s3 = inlined_call_operand.vmem [shape: f32[2,8,128], index: 3, kind: input, shape index: {}]
  %s4 = inlined_call_operand.hbm [shape: f32[2,8,128], index: 4, kind: output, shape index: {0}]
  %s5 = inlined_call_operand.hbm [shape: f32[2,8,8], index: 5, kind: output, shape index: {1}]
  %6 = xla_tuple %s4, %s5
  %s7 = sld [smem:[#allocation0]]
  $region30: #{dot_product_attention.1} parent=0
    _
  %s9 = ssub.s32 1, %s7
  %s10 = scalar_select 0, %s9, %s7
  %s11 = sshll.u32 %s0, 4
  %s12 = int_to_ptr.vmem [resolvable:$true] %s11
  %14 = dma.vmem_to_smem %s12, 16, [#allocation3], [#allocation2]
  %15 = dma.done [#allocation2], 16
  %16 = sfence
  $region1: #{dot_product_attention.1} parent=0
    #allocation4 [shape = 'u8[8192]{0}', space=vmem, size = 0x2000, scoped, tag = 'output window, operand 0, single buffered']
    #allocation5 [shape = 's32[1]{0}', space=sflag, size = 0x4, scoped, tag = 'scoped memory for dot_product_attention.1']
    #allocation6 [shape = 'u8[8192]{0}', space=vmem, size = 0x2000, scoped, tag = 'output window, operand 1, single buffered']
    #allocation7 [shape = 's32[1]{0}', space=sflag, size = 0x4, scoped, tag = 'scoped memory for dot_product_attention.1']
    %17 = vsyncpa [#allocation5], 0
    %18 = vsyncpa [#allocation7], 0
    // Predicated region
    $region2: #{dot_product_attention.1} parent=1 // pred_check
      _
    $region3: #{dot_product_attention.1} parent=1 // pred_check_branch
      %20 = sbr.rel (0) target = $region5
    $region4: #{dot_product_attention.1} parent=1 // pred_region
      _
    $region5: #{dot_product_attention.1} parent=1 // pred_fallthru
      _
    // Predicated region
    $region6: #{dot_product_attention.1} parent=1 // pred_check
      _
    $region7: #{dot_product_attention.1} parent=1 // pred_check_branch
      %22 = sbr.rel (0) target = $region9
    $region8: #{dot_product_attention.1} parent=1 // pred_region
      _
    $region9: #{dot_product_attention.1} parent=1 // pred_fallthru
      _
    // Predicated region
    $region10: #{dot_product_attention.1} parent=1 // pred_check
      _
    $region11: #{dot_product_attention.1} parent=1 // pred_check_branch
      %24 = sbr.rel (0) target = $region13
    $region12: #{dot_product_attention.1} parent=1 // pred_region
      _
    $region13: #{dot_product_attention.1} parent=1 // pred_fallthru
      _
    %v25 = vld [vmem:[%s1] sm:$0xff]
    %v26 = vld [vmem:[%s1 + $0x8] sm:$0xff]
    %v27 = vld [vmem:[%s2] sm:$0xff]
    %v28 = vld [vmem:[%s2 + $0x8] sm:$0xff]
    %v29 = vld [vmem:[%s3] sm:$0xff]
    %v30 = vld [vmem:[%s3 + $0x8] sm:$0xff]
    %v31 = vmul.f32 %v25, 0.17677669
    %v32 = vmul.f32 %v26, 0.17677669
    %33 = vmatprep.subr.mxu0 0.0
    %34 = vmatpush1.xpose.msra.mxu0 %v27
    %35 = vmatprep.subr.mxu0 0.0
    %36 = vmatpush1.xpose.msra.mxu0 0.0
    %37 = vmatprep.subr.mxu0 0.0
    %38 = vmatpush1.xpose.msra.mxu0 0.0
    %39 = vmatprep.subr.mxu0 0.0
    %40 = vmatpush1.xpose.msra.mxu0 0.0
    %41 = vmatprep.subr.mxu0 0.0
    %42 = vmatpush1.xpose.msra.mxu0 0.0
    %43 = vmatprep.subr.mxu0 0.0
    %44 = vmatpush1.xpose.msra.mxu0 0.0
    %45 = vmatprep.subr.mxu0 0.0
    %46 = vmatpush1.xpose.msra.mxu0 0.0
    %47 = vmatprep.subr.mxu0 0.0
    %48 = vmatpush1.xpose.msra.mxu0 0.0
    %49 = vmatprep.subr.mxu0 0.0
    %50 = vmatpush1.xpose.msra.mxu0 0.0
    %51 = vmatprep.subr.mxu0 0.0
    %52 = vmatpush1.xpose.msra.mxu0 0.0
    %53 = vmatprep.subr.mxu0 0.0
    %54 = vmatpush1.xpose.msra.mxu0 0.0
    %55 = vmatprep.subr.mxu0 0.0
    %56 = vmatpush1.xpose.msra.mxu0 0.0
    %57 = vmatprep.subr.mxu0 0.0
    %58 = vmatpush1.xpose.msra.mxu0 0.0
    %59 = vmatprep.subr.mxu0 0.0
    %60 = vmatpush1.xpose.msra.mxu0 0.0
    %61 = vmatprep.subr.mxu0 0.0
    %62 = vmatpush1.xpose.msra.mxu0 0.0
    %63 = vmatprep.subr.mxu0 0.0
    %64 = vmatpush1.xpose.msra.mxu0 0.0
    %65 = vmatprep.subr.mxu0 0.0
    %66 = vmatpush1.xpose.msra.mxu0 0.0
    %67 = vmatprep.subr.mxu0 0.0
    %68 = vmatpush1.xpose.msra.mxu0 0.0
    %69 = vmatprep.subr.mxu0 0.0
    %70 = vmatpush1.xpose.msra.mxu0 0.0
    %71 = vmatprep.subr.mxu0 0.0
    %72 = vmatpush1.xpose.msra.mxu0 0.0
    %73 = vmatprep.subr.mxu0 0.0
    %74 = vmatpush1.xpose.msra.mxu0 0.0
    %75 = vmatprep.subr.mxu0 0.0
    %76 = vmatpush1.xpose.msra.mxu0 0.0
    %77 = vmatprep.subr.mxu0 0.0
    %78 = vmatpush1.xpose.msra.mxu0 0.0
    %79 = vmatprep.subr.mxu0 0.0
    %80 = vmatpush1.xpose.msra.mxu0 0.0
    %81 = vmatprep.subr.mxu0 0.0
    %82 = vmatpush1.xpose.msra.mxu0 0.0
    %83 = vmatprep.subr.mxu0 0.0
    %84 = vmatpush1.xpose.msra.mxu0 0.0
    %85 = vmatprep.subr.mxu0 0.0
    %86 = vmatpush1.xpose.msra.mxu0 0.0
    %87 = vmatprep.subr.mxu0 0.0
    %88 = vmatpush1.xpose.msra.mxu0 0.0
    %89 = vmatprep.subr.mxu0 0.0
    %90 = vmatpush1.xpose.msra.mxu0 0.0
    %91 = vmatprep.subr.mxu0 0.0
    %92 = vmatpush1.xpose.msra.mxu0 0.0
    %93 = vmatprep.subr.mxu0 0.0
    %94 = vmatpush1.xpose.msra.mxu0 0.0
    %95 = vmatprep.subr.mxu0 0.0
    %96 = vmatpush1.xpose.msra.mxu0 0.0
    %97 = vmatprep.mubr.f32.mxu0 0.0
    %98 = vmatmul.mubr.f32.gmra.mrb[0].mxu0 %v31
    %v99 = vpop.f32.mrb[0].mxu0
    %v100 = vadd.f32 0.0, %v99
    %v101 = vpop.f32.mrb[0].mxu0
    %102 = vdwg.mxu0
    %103 = vmatprep.subr.mxu0 0.0
    %104 = vmatpush1.xpose.msra.mxu0 %v28
    %105 = vmatprep.subr.mxu0 0.0
    %106 = vmatpush1.xpose.msra.mxu0 0.0
    %107 = vmatprep.subr.mxu0 0.0
    %108 = vmatpush1.xpose.msra.mxu0 0.0
    %109 = vmatprep.subr.mxu0 0.0
    %110 = vmatpush1.xpose.msra.mxu0 0.0
    %111 = vmatprep.subr.mxu0 0.0
    %112 = vmatpush1.xpose.msra.mxu0 0.0
    %113 = vmatprep.subr.mxu0 0.0
    %114 = vmatpush1.xpose.msra.mxu0 0.0
    %115 = vmatprep.subr.mxu0 0.0
    %116 = vmatpush1.xpose.msra.mxu0 0.0
    %117 = vmatprep.subr.mxu0 0.0
    %118 = vmatpush1.xpose.msra.mxu0 0.0
    %119 = vmatprep.subr.mxu0 0.0
    %120 = vmatpush1.xpose.msra.mxu0 0.0
    %121 = vmatprep.subr.mxu0 0.0
    %122 = vmatpush1.xpose.msra.mxu0 0.0
    %123 = vmatprep.subr.mxu0 0.0
    %124 = vmatpush1.xpose.msra.mxu0 0.0
    %125 = vmatprep.subr.mxu0 0.0
    %126 = vmatpush1.xpose.msra.mxu0 0.0
    %127 = vmatprep.subr.mxu0 0.0
    %128 = vmatpush1.xpose.msra.mxu0 0.0
    %129 = vmatprep.subr.mxu0 0.0
    %130 = vmatpush1.xpose.msra.mxu0 0.0
    %131 = vmatprep.subr.mxu0 0.0
    %132 = vmatpush1.xpose.msra.mxu0 0.0
    %133 = vmatprep.subr.mxu0 0.0
    %134 = vmatpush1.xpose.msra.mxu0 0.0
    %135 = vmatprep.subr.mxu0 0.0
    %136 = vmatpush1.xpose.msra.mxu0 0.0
    %137 = vmatprep.subr.mxu0 0.0
    %138 = vmatpush1.xpose.msra.mxu0 0.0
    %139 = vmatprep.subr.mxu0 0.0
    %140 = vmatpush1.xpose.msra.mxu0 0.0
    %141 = vmatprep.subr.mxu0 0.0
    %142 = vmatpush1.xpose.msra.mxu0 0.0
    %143 = vmatprep.subr.mxu0 0.0
    %144 = vmatpush1.xpose.msra.mxu0 0.0
    %145 = vmatprep.subr.mxu0 0.0
    %146 = vmatpush1.xpose.msra.mxu0 0.0
    %147 = vmatprep.subr.mxu0 0.0
    %148 = vmatpush1.xpose.msra.mxu0 0.0
    %149 = vmatprep.subr.mxu0 0.0
    %150 = vmatpush1.xpose.msra.mxu0 0.0
    %151 = vmatprep.subr.mxu0 0.0
    %152 = vmatpush1.xpose.msra.mxu0 0.0
    %153 = vmatprep.subr.mxu0 0.0
    %154 = vmatpush1.xpose.msra.mxu0 0.0
    %155 = vmatprep.subr.mxu0 0.0
    %156 = vmatpush1.xpose.msra.mxu0 0.0
    %157 = vmatprep.subr.mxu0 0.0
    %158 = vmatpush1.xpose.msra.mxu0 0.0
    %159 = vmatprep.subr.mxu0 0.0
    %160 = vmatpush1.xpose.msra.mxu0 0.0
    %161 = vmatprep.subr.mxu0 0.0
    %162 = vmatpush1.xpose.msra.mxu0 0.0
    %163 = vmatprep.subr.mxu0 0.0
    %164 = vmatpush1.xpose.msra.mxu0 0.0
    %165 = vmatprep.subr.mxu0 0.0
    %166 = vmatpush1.xpose.msra.mxu0 0.0
    %167 = vmatprep.mubr.f32.mxu0 0.0
    %168 = vmatmul.mubr.f32.gmra.mrb[0].mxu0 %v32
    %v169 = vpop.f32.mrb[0].mxu0
    %v170 = vadd.f32 0.0, %v169
    %v171 = vpop.f32.mrb[0].mxu0
    %172 = vdwg.mxu0
    %s173 = smul.u32 0, 2
    %v174 = vlaneseq
    %v175 = vand.u32 %v174, 127
    %s176 = sld [smem:[#allocation3 + %s173]]
    %v177 = vstv %s176
    %s178 = sadd.s32 %s173, 1
    %s179 = sld [smem:[#allocation3 + %s178]]
    %v180 = vstv %s179
    %vm181 = vcmp.lt.s32.totalorder %v175, %v177
    %vm182 = vcmp.lt.s32.totalorder %v175, %v180
    %v183 = vsel %vm181, 1, 0
    %v184 = vsel %vm182, 1, 0
    %v185 = vlaneseq
    %v186 = vshrl.u32 %v185, 7
    %v187 = vsub.s32 0, %v186
    %v188 = vrot.slane %v183, %v187
    %v189 = vlaneseq
    %v190 = vshrl.u32 %v189, 7
    %v191 = vsub.s32 0, %v190
    %v192 = vrot.slane %v184, %v191
    %vm193 = vcmp.eq.s32.totalorder %v188, 1
    %vm194 = vcmp.eq.s32.totalorder %v192, 1
    %v195 = vsel %vm193, %v100, -1000000.0
    %v196 = vsel %vm194, %v170, -1000000.0
    %vm197 = vcmask 64512
    %v198 = vsel %vm197, %v195, -inf
    %199 = vmax.xlane.f32.xlu0 %v198
    %v200 = vpop.xlane.xlu0 %199
    %v201 = vsel %vm197, %v196, -inf
    %202 = vmax.xlane.f32.xlu0 %v201
    %v203 = vpop.xlane.xlu0 %202
    %v204 = vsub.f32 %v195, %v200
    %v205 = vsub.f32 %v196, %v203
    %v206 = vmul.f32 %v204, 1.442695
    %v207 = vpow.pop %v206
    %v208 = vmul.f32 %v205, 1.442695
    %v209 = vpow.pop %v208
    %v210 = vsel %vm197, %v207, 0.0
    %211 = vadd.xlane.f32.xlu0 %v210
    %v212 = vpop.xlane.xlu0 %211
    %v213 = vsel %vm197, %v209, 0.0
    %214 = vadd.xlane.f32.xlu0 %v213
    %v215 = vpop.xlane.xlu0 %214
    %v216 = vrcp.pop %v212
    %v217 = vrcp.pop %v215
    %v218 = vmul.f32 %v207, %v216
    %v219 = vmul.f32 %v209, %v217
    %220 = vst.msk [vmem:[#allocation6] sm:$0xff] %vm197, %v218
    %221 = vst.msk [vmem:[#allocation6 + $0x8] sm:$0xff] %vm197, %v219
    %v223 = vsel %vm197, %v218, 0
    %225 = vmatprep.subr.mxu0 0.0
    %226 = vmatpush1.msra.mxu0 %v29
    %227 = vmatprep.subr.mxu0 0.0
    %228 = vmatpush1.msra.mxu0 0.0
    %229 = vmatprep.subr.mxu0 0.0
    %230 = vmatpush1.msra.mxu0 0.0
    %231 = vmatprep.subr.mxu0 0.0
    %232 = vmatpush1.msra.mxu0 0.0
    %233 = vmatprep.subr.mxu0 0.0
    %234 = vmatpush1.msra.mxu0 0.0
    %235 = vmatprep.subr.mxu0 0.0
    %236 = vmatpush1.msra.mxu0 0.0
    %237 = vmatprep.subr.mxu0 0.0
    %238 = vmatpush1.msra.mxu0 0.0
    %239 = vmatprep.subr.mxu0 0.0
    %240 = vmatpush1.msra.mxu0 0.0
    %241 = vmatprep.subr.mxu0 0.0
    %242 = vmatpush1.msra.mxu0 0.0
    %243 = vmatprep.subr.mxu0 0.0
    %244 = vmatpush1.msra.mxu0 0.0
    %245 = vmatprep.subr.mxu0 0.0
    %246 = vmatpush1.msra.mxu0 0.0
    %247 = vmatprep.subr.mxu0 0.0
    %248 = vmatpush1.msra.mxu0 0.0
    %249 = vmatprep.subr.mxu0 0.0
    %250 = vmatpush1.msra.mxu0 0.0
    %251 = vmatprep.subr.mxu0 0.0
    %252 = vmatpush1.msra.mxu0 0.0
    %253 = vmatprep.subr.mxu0 0.0
    %254 = vmatpush1.msra.mxu0 0.0
    %255 = vmatprep.subr.mxu0 0.0
    %256 = vmatpush1.msra.mxu0 0.0
    %257 = vmatprep.subr.mxu0 0.0
    %258 = vmatpush1.msra.mxu0 0.0
    %259 = vmatprep.subr.mxu0 0.0
    %260 = vmatpush1.msra.mxu0 0.0
    %261 = vmatprep.subr.mxu0 0.0
    %262 = vmatpush1.msra.mxu0 0.0
    %263 = vmatprep.subr.mxu0 0.0
    %264 = vmatpush1.msra.mxu0 0.0
    %265 = vmatprep.subr.mxu0 0.0
    %266 = vmatpush1.msra.mxu0 0.0
    %267 = vmatprep.subr.mxu0 0.0
    %268 = vmatpush1.msra.mxu0 0.0
    %269 = vmatprep.subr.mxu0 0.0
    %270 = vmatpush1.msra.mxu0 0.0
    %271 = vmatprep.subr.mxu0 0.0
    %272 = vmatpush1.msra.mxu0 0.0
    %273 = vmatprep.subr.mxu0 0.0
    %274 = vmatpush1.msra.mxu0 0.0
    %275 = vmatprep.subr.mxu0 0.0
    %276 = vmatpush1.msra.mxu0 0.0
    %277 = vmatprep.subr.mxu0 0.0
    %278 = vmatpush1.msra.mxu0 0.0
    %279 = vmatprep.subr.mxu0 0.0
    %280 = vmatpush1.msra.mxu0 0.0
    %281 = vmatprep.subr.mxu0 0.0
    %282 = vmatpush1.msra.mxu0 0.0
    %283 = vmatprep.subr.mxu0 0.0
    %284 = vmatpush1.msra.mxu0 0.0
    %285 = vmatprep.subr.mxu0 0.0
    %286 = vmatpush1.msra.mxu0 0.0
    %287 = vmatprep.subr.mxu0 0.0
    %288 = vmatpush1.msra.mxu0 0.0
    %289 = vmatprep.mubr.f32.mxu0 0.0
    %290 = vmatmul.mubr.f32.gmra.mrb[0].mxu0 %v223
    %v291 = vpop.f32.mrb[0].mxu0
    %v292 = vadd.f32 0.0, %v291
    %v293 = vpop.f32.mrb[0].mxu0
    %294 = vdwg.mxu0
    %v296 = vsel %vm197, %v219, 0
    %298 = vmatprep.subr.mxu0 0.0
    %299 = vmatpush1.msra.mxu0 %v30
    %300 = vmatprep.subr.mxu0 0.0
    %301 = vmatpush1.msra.mxu0 0.0
    %302 = vmatprep.subr.mxu0 0.0
    %303 = vmatpush1.msra.mxu0 0.0
    %304 = vmatprep.subr.mxu0 0.0
    %305 = vmatpush1.msra.mxu0 0.0
    %306 = vmatprep.subr.mxu0 0.0
    %307 = vmatpush1.msra.mxu0 0.0
    %308 = vmatprep.subr.mxu0 0.0
    %309 = vmatpush1.msra.mxu0 0.0
    %310 = vmatprep.subr.mxu0 0.0
    %311 = vmatpush1.msra.mxu0 0.0
    %312 = vmatprep.subr.mxu0 0.0
    %313 = vmatpush1.msra.mxu0 0.0
    %314 = vmatprep.subr.mxu0 0.0
    %315 = vmatpush1.msra.mxu0 0.0
    %316 = vmatprep.subr.mxu0 0.0
    %317 = vmatpush1.msra.mxu0 0.0
    %318 = vmatprep.subr.mxu0 0.0
    %319 = vmatpush1.msra.mxu0 0.0
    %320 = vmatprep.subr.mxu0 0.0
    %321 = vmatpush1.msra.mxu0 0.0
    %322 = vmatprep.subr.mxu0 0.0
    %323 = vmatpush1.msra.mxu0 0.0
    %324 = vmatprep.subr.mxu0 0.0
    %325 = vmatpush1.msra.mxu0 0.0
    %326 = vmatprep.subr.mxu0 0.0
    %327 = vmatpush1.msra.mxu0 0.0
    %328 = vmatprep.subr.mxu0 0.0
    %329 = vmatpush1.msra.mxu0 0.0
    %330 = vmatprep.subr.mxu0 0.0
    %331 = vmatpush1.msra.mxu0 0.0
    %332 = vmatprep.subr.mxu0 0.0
    %333 = vmatpush1.msra.mxu0 0.0
    %334 = vmatprep.subr.mxu0 0.0
    %335 = vmatpush1.msra.mxu0 0.0
    %336 = vmatprep.subr.mxu0 0.0
    %337 = vmatpush1.msra.mxu0 0.0
    %338 = vmatprep.subr.mxu0 0.0
    %339 = vmatpush1.msra.mxu0 0.0
    %340 = vmatprep.subr.mxu0 0.0
    %341 = vmatpush1.msra.mxu0 0.0
    %342 = vmatprep.subr.mxu0 0.0
    %343 = vmatpush1.msra.mxu0 0.0
    %344 = vmatprep.subr.mxu0 0.0
    %345 = vmatpush1.msra.mxu0 0.0
    %346 = vmatprep.subr.mxu0 0.0
    %347 = vmatpush1.msra.mxu0 0.0
    %348 = vmatprep.subr.mxu0 0.0
    %349 = vmatpush1.msra.mxu0 0.0
    %350 = vmatprep.subr.mxu0 0.0
    %351 = vmatpush1.msra.mxu0 0.0
    %352 = vmatprep.subr.mxu0 0.0
    %353 = vmatpush1.msra.mxu0 0.0
    %354 = vmatprep.subr.mxu0 0.0
    %355 = vmatpush1.msra.mxu0 0.0
    %356 = vmatprep.subr.mxu0 0.0
    %357 = vmatpush1.msra.mxu0 0.0
    %358 = vmatprep.subr.mxu0 0.0
    %359 = vmatpush1.msra.mxu0 0.0
    %360 = vmatprep.subr.mxu0 0.0
    %361 = vmatpush1.msra.mxu0 0.0
    %362 = vmatprep.mubr.f32.mxu0 0.0
    %363 = vmatmul.mubr.f32.gmra.mrb[0].mxu0 %v296
    %v364 = vpop.f32.mrb[0].mxu0
    %v365 = vadd.f32 0.0, %v364
    %v366 = vpop.f32.mrb[0].mxu0
    %367 = vdwg.mxu0
    %368 = vst [vmem:[#allocation4] sm:$0xff] %v292
    %369 = vst [vmem:[#allocation4 + $0x8] sm:$0xff] %v365
    // Predicated region
    $region14: #{dot_product_attention.1} parent=1 // pred_check
      _
    $region15: #{dot_product_attention.1} parent=1 // pred_check_branch
      %371 = sbr.rel (0) target = $region17
    $region16: #{dot_product_attention.1} parent=1 // pred_region
      %s373 = ssub.s32 256, 256
      %374 = vsyncadd [#allocation5], %s373
      %s375 = sshll.u32 [#allocation4], 4
      %s376 = int_to_ptr.vmem [resolvable:$true] %s375
      %381 = dma.vmem_to_hbm [thread:$0]  %s376, 256, %s4, [#allocation5], 128, 128, 8
    $region17: #{dot_product_attention.1} parent=1 // pred_fallthru
      _
    // Predicated region
    $region18: #{dot_product_attention.1} parent=1 // pred_check
      _
    $region19: #{dot_product_attention.1} parent=1 // pred_check_branch
      %383 = sbr.rel (0) target = $region21
    $region20: #{dot_product_attention.1} parent=1 // pred_region
      %s385 = ssub.s32 256, 256
      %386 = vsyncadd [#allocation7], %s385
      %s387 = sshll.u32 [#allocation6], 4
      %s388 = int_to_ptr.vmem [resolvable:$true] %s387
      %393 = dma.vmem_to_hbm [thread:$0]  %s388, 256, %s5, [#allocation7], 128, 128, 8
    $region21: #{dot_product_attention.1} parent=1 // pred_fallthru
      _
    // Predicated region
    $region22: #{dot_product_attention.1} parent=1 // pred_check
      _
    $region23: #{dot_product_attention.1} parent=1 // pred_check_branch
      %395 = sbr.rel (0) target = $region25
    $region24: #{dot_product_attention.1} parent=1 // pred_region
      %396 = dma.done [#allocation5], 256
    $region25: #{dot_product_attention.1} parent=1 // pred_fallthru
      _
    // Predicated region
    $region26: #{dot_product_attention.1} parent=1 // pred_check
      _
    $region27: #{dot_product_attention.1} parent=1 // pred_check_branch
      %398 = sbr.rel (0) target = $region29
    $region28: #{dot_product_attention.1} parent=1 // pred_region
      %399 = dma.done [#allocation7], 256
    $region29: #{dot_product_attention.1} parent=1 // pred_fallthru
      _
    %400 = vsyncpa [#allocation5], 1
    %401 = vsyncpa [#allocation7], 1

</llo_original>
